<compile_context>
chip_gen: v6e
topology: v6e:2x2x1
jax: 0.10.0
libtpu: 0.0.40
codegen_flags: <defaults>
</compile_context>

<pallas_src>
import functools

import jax
import jax.numpy as jnp
from jax.experimental import pallas as pl
from jax.experimental.pallas import tpu as pltpu


# ---------------------------------------------------------------------------
# Fused path: pool + conv_du + sigmoid + scale in one kernel (grid over batch).
# ---------------------------------------------------------------------------
def _fused_kernel(x_ref, w1t_ref, w2_ref, o_ref, *, hw):
    """x_ref/o_ref: (C, HW) one batch element; w1t_ref/w2_ref: (C, Cr)."""
    x = x_ref[...]                                                   # native dtype
    xf = x.astype(jnp.float32)

    pooled = jnp.sum(xf, axis=-1, keepdims=True) * (1.0 / hw)        # (C, 1) mean
    w1t = w1t_ref[...].astype(jnp.float32)                           # (C, Cr)
    w2 = w2_ref[...].astype(jnp.float32)                             # (C, Cr)
    # hidden_j = relu( sum_c w1[j, c] * pooled_c )        -> (1, Cr)
    hid = jnp.maximum(jnp.sum(w1t * pooled, axis=0, keepdims=True), 0.0)
    # att_c = sigmoid( sum_j w2[c, j] * hidden_j )        -> (C, 1)
    att = jax.nn.sigmoid(jnp.sum(w2 * hid, axis=1, keepdims=True))

    # Scale in x's native dtype (avoids a cast round trip for bf16 inputs).
    o_ref[...] = x * att.astype(x.dtype)


# ---------------------------------------------------------------------------
# Fallback path (large H*W): pass 1 pool+attn, pass 2 scale.
# ---------------------------------------------------------------------------
def _choose_spatial_tile(hw, c, itemsize):
    """Largest lane tile: full HW if it fits, else a 128-multiple tile ~<= 2 MiB/block,
    preferring one that divides HW exactly so the ragged-tail mask is never needed."""
    target_block_bytes = 2 * 1024 * 1024
    max_lanes = max(128, target_block_bytes // max(1, c * itemsize))
    if hw <= max_lanes:
        return hw                                   # full spatial extent
    max_chunks = max_lanes // 128
    if hw % 128 == 0:
        hw128 = hw // 128
        for m in range(max_chunks, 0, -1):          # largest divisor tile
            if hw128 % m == 0 and m * 128 >= 512:
                return m * 128
    return max_chunks * 128                          # lane-aligned, possibly ragged tail


def _pool_attn_kernel(x_ref, w1t_ref, w2_ref, att_ref, acc_ref, *, hw, tl):
    """Accumulate global-avg-pool over spatial tiles into a lane-dense scratch;
    finalize conv_du at the last tile.

    x_ref:   (C, TL)   current spatial tile of one batch element
    w1t_ref: (C, Cr)   transpose of first 1x1 conv weight
    w2_ref:  (C, Cr)   second 1x1 conv weight
    att_ref: (C, 1)    final per-channel attention (written once, at the last tile)
    acc_ref: (C, 128)  lane-dense VMEM partial-sum accumulator
    """
    t = pl.program_id(1)
    last = pl.num_programs(1) - 1
    n_chunks = tl // 128

    @pl.when(t == 0)
    def _init():
        acc_ref[...] = jnp.zeros_like(acc_ref)

    x = x_ref[...].astype(jnp.float32)                               # (C, TL)

    def accumulate(xv):
        for k in range(n_chunks):                                    # VPU adds only
            acc_ref[...] += xv[:, k * 128:(k + 1) * 128]

    if hw % tl != 0:
        # Mask only on the ragged last tile; all other tiles take the cheap path.
        @pl.when(t != last)
        def _plain():
            accumulate(x)

        @pl.when(t == last)
        def _masked():
            lane = jax.lax.broadcasted_iota(jnp.int32, x.shape, 1)
            accumulate(jnp.where(t * tl + lane < hw, x, 0.0))
    else:
        accumulate(x)

    @pl.when(t == last)
    def _finalize():
        pooled = jnp.sum(acc_ref[...], axis=-1, keepdims=True) * (1.0 / hw)   # (C, 1)
        w1t = w1t_ref[...].astype(jnp.float32)                                # (C, Cr)
        w2 = w2_ref[...].astype(jnp.float32)                                  # (C, Cr)
        hid = jnp.maximum(jnp.sum(w1t * pooled, axis=0, keepdims=True), 0.0)  # (1, Cr)
        att_ref[...] = jax.nn.sigmoid(jnp.sum(w2 * hid, axis=1, keepdims=True))


def _scale_kernel(x_ref, att_ref, o_ref):
    """o = x * att (per-channel broadcast over the spatial/lane axis), native dtype."""
    o_ref[...] = x_ref[...] * att_ref[...].astype(x_ref.dtype)


# ---------------------------------------------------------------------------
# Wrapper
# ---------------------------------------------------------------------------
@jax.jit
def ca_layer(x, conv1_w, conv2_w):
    """Equivalent of CALayer(channel, reduction, bias=False).forward(x) for NCHW x.

    conv1_w: (C//r, C, 1, 1)   conv_du[0] weight
    conv2_w: (C, C//r, 1, 1)   conv_du[2] weight
    """
    b, c, h, w = x.shape
    hw = h * w
    cr = conv1_w.shape[0]
    itemsize = x.dtype.itemsize

    x3 = x.reshape(b, c, hw)                 # contiguous merge: no data movement
    w1t = conv1_w.reshape(cr, c).T           # (C, Cr)
    w2 = conv2_w.reshape(c, cr)              # (C, Cr)

    slab_bytes = c * hw * itemsize           # one batch element's (C, HW) slab

    # --- Fused single-pass path: 1 read + 1 write of x --------------------
    # in + out blocks, each double-buffered => ~4x slab in VMEM; keep under the
    # default scoped-VMEM limit on every generation (16 MiB on v5e).
    if 4 * slab_bytes <= 12 * 1024 * 1024:
        slab_spec = pl.BlockSpec((None, c, hw), lambda bi: (bi, 0, 0))
        prm_spec = pl.BlockSpec((c, cr), lambda bi: (0, 0))
        y = pl.pallas_call(
            functools.partial(_fused_kernel, hw=hw),
            out_shape=jax.ShapeDtypeStruct((b, c, hw), x.dtype),
            grid=(b,),
            in_specs=[slab_spec, prm_spec, prm_spec],
            out_specs=slab_spec,
            compiler_params=pltpu.CompilerParams(
                dimension_semantics=("parallel",)),
        )(x3, w1t, w2)
        return y.reshape(b, c, h, w)

    # --- Fallback two-pass path (very large H*W slabs) ---------------------
    # TODO(synk): for B=1 on v7x, add an extra parallel spatial-split grid axis so
    # both TensorCores participate in the pooling sweep.
    tl = _choose_spatial_tile(hw, c, itemsize)
    n_t = pl.cdiv(hw, tl)

    x_spec = pl.BlockSpec((None, c, tl), lambda bi, ti: (bi, 0, ti))
    prm_spec = pl.BlockSpec((c, cr), lambda bi, ti: (0, 0))
    att_spec = pl.BlockSpec((None, c, 1), lambda bi, ti: (bi, 0, 0))

    # Pass 1: fused global-avg-pool + conv_du (1x1 -> ReLU -> 1x1 -> sigmoid).
    att = pl.pallas_call(
        functools.partial(_pool_attn_kernel, hw=hw, tl=tl),
        out_shape=jax.ShapeDtypeStruct((b, c, 1), jnp.float32),
        grid=(b, n_t),
        in_specs=[x_spec, prm_spec, prm_spec],
        out_specs=att_spec,
        scratch_shapes=[pltpu.VMEM((c, 128), jnp.float32)],
        compiler_params=pltpu.CompilerParams(
            dimension_semantics=("parallel", "arbitrary")),
    )(x3, w1t, w2)

    # Pass 2: broadcast scale x * att.
    y = pl.pallas_call(
        _scale_kernel,
        out_shape=jax.ShapeDtypeStruct((b, c, hw), x.dtype),
        grid=(b, n_t),
        in_specs=[x_spec, att_spec],
        out_specs=x_spec,
        compiler_params=pltpu.CompilerParams(
            dimension_semantics=("parallel", "parallel")),
    )(x3, att)

    return y.reshape(b, c, h, w)


def _reference(x, conv1_w, conv2_w):
    """Pure-JAX reference matching the PyTorch CALayer forward."""
    c = x.shape[1]
    cr = conv1_w.shape[0]
    xf = x.astype(jnp.float32)
    p = jnp.mean(xf, axis=(2, 3), keepdims=True)                          # (B, C, 1, 1)
    hdn = jnp.maximum(
        jnp.einsum("bcij,oc->boij", p, conv1_w.reshape(cr, c)), 0.0)      # (B, Cr, 1, 1)
    att = jax.nn.sigmoid(
        jnp.einsum("bcij,oc->boij", hdn, conv2_w.reshape(c, cr)))         # (B, C, 1, 1)
    return (xf * att).astype(x.dtype)


if __name__ == "__main__":
    key = jax.random.PRNGKey(0)
    B, C, H, W = 2, 4, 16, 16
    reduction = 4
    Cr = C // reduction

    kx, k1, k2 = jax.random.split(key, 3)
    x = jax.random.normal(kx, (B, C, H, W), dtype=jnp.float32)
    # Conv2d(..., bias=False) weights, shaped exactly like the PyTorch module's.
    conv1_w = 0.5 * jax.random.normal(k1, (Cr, C, 1, 1), dtype=jnp.float32)
    conv2_w = 0.5 * jax.random.normal(k2, (C, Cr, 1, 1), dtype=jnp.float32)

    y = ca_layer(x, conv1_w, conv2_w)
    y = jax.block_until_ready(y)
    y_ref = _reference(x, conv1_w, conv2_w)

    if jnp.allclose(y, y_ref, atol=1e-5, rtol=1e-5):
        print("KERNEL_OK")
    else:
        print("MISMATCH max_abs_err=", float(jnp.max(jnp.abs(y - y_ref))))
</pallas_src>

<mosaic_0001>
module attributes {stable_mosaic.version = 11 : i64} {
  func.func @_fused_kernel(%arg0: i32, %arg1: memref<1x4x256xf32, #tpu.memory_space<vmem>>, %arg2: memref<4x1xf32, #tpu.memory_space<vmem>>, %arg3: memref<4x1xf32, #tpu.memory_space<vmem>>, %arg4: memref<1x4x256xf32, #tpu.memory_space<vmem>>) attributes {dimension_semantics = [#tpu.dimension_semantics<parallel>], iteration_bounds = array<i64: 2>, scalar_prefetch = 0 : i64, scratch_operands = 0 : i64, tpu.core_type = #tpu.core_type<tc>, window_params = [{transform_indices = @transform_0, window_bounds = array<i64: 1, 4, 256>}, {pipeline_mode = #tpu.pipeline_mode<synchronous>, transform_indices = @transform_1, window_bounds = array<i64: 4, 1>}, {pipeline_mode = #tpu.pipeline_mode<synchronous>, transform_indices = @transform_2, window_bounds = array<i64: 4, 1>}, {transform_indices = @transform_3, window_bounds = array<i64: 1, 4, 256>}]} {
    %c0 = arith.constant 0 : index
    %c0_0 = arith.constant 0 : index
    %c0_1 = arith.constant 0 : index
    %0 = vector.load %arg1[%c0, %c0_0, %c0_1] : memref<1x4x256xf32, #tpu.memory_space<vmem>>, vector<1x4x256xf32>
    %1 = vector.shape_cast %0 : vector<1x4x256xf32> to vector<4x256xf32>
    %cst = arith.constant dense<0.000000e+00> : vector<4xf32>
    %2 = vector.multi_reduction <add>, %1, %cst [1] : vector<4x256xf32> to vector<4xf32>
    %3 = vector.shape_cast %2 : vector<4xf32> to vector<4x1xf32>
    %cst_2 = arith.constant 3.906250e-03 : f32
    %4 = vector.broadcast %cst_2 : f32 to vector<4x1xf32>
    %5 = arith.mulf %3, %4 : vector<4x1xf32>
    %c0_3 = arith.constant 0 : index
    %c0_4 = arith.constant 0 : index
    %6 = vector.load %arg2[%c0_3, %c0_4] : memref<4x1xf32, #tpu.memory_space<vmem>>, vector<4x1xf32>
    %c0_5 = arith.constant 0 : index
    %c0_6 = arith.constant 0 : index
    %7 = vector.load %arg3[%c0_5, %c0_6] : memref<4x1xf32, #tpu.memory_space<vmem>>, vector<4x1xf32>
    %8 = arith.mulf %6, %5 : vector<4x1xf32>
    %cst_7 = arith.constant dense<0.000000e+00> : vector<1xf32>
    %9 = vector.multi_reduction <add>, %8, %cst_7 [0] : vector<4x1xf32> to vector<1xf32>
    %10 = vector.shape_cast %9 : vector<1xf32> to vector<1x1xf32>
    %cst_8 = arith.constant 0.000000e+00 : f32
    %11 = vector.broadcast %cst_8 : f32 to vector<1x1xf32>
    %12 = arith.maximumf %10, %11 : vector<1x1xf32>
    %13 = vector.broadcast %12 : vector<1x1xf32> to vector<4x1xf32>
    %14 = arith.mulf %7, %13 : vector<4x1xf32>
    %cst_9 = arith.constant dense<0.000000e+00> : vector<4xf32>
    %15 = vector.multi_reduction <add>, %14, %cst_9 [1] : vector<4x1xf32> to vector<4xf32>
    %16 = vector.shape_cast %15 : vector<4xf32> to vector<4x1xf32>
    %17 = arith.negf %16 : vector<4x1xf32>
    %18 = math.exp %17 : vector<4x1xf32>
    %cst_10 = arith.constant 1.000000e+00 : f32
    %19 = vector.broadcast %cst_10 : f32 to vector<4x1xf32>
    %20 = arith.addf %19, %18 : vector<4x1xf32>
    %21 = arith.divf %19, %20 : vector<4x1xf32>
    %22 = vector.broadcast %21 : vector<4x1xf32> to vector<4x256xf32>
    %23 = arith.mulf %1, %22 : vector<4x256xf32>
    %c0_11 = arith.constant 0 : index
    %c0_12 = arith.constant 0 : index
    %c0_13 = arith.constant 0 : index
    %24 = vector.load %arg4[%c0_11, %c0_12, %c0_13] : memref<1x4x256xf32, #tpu.memory_space<vmem>>, vector<1x4x256xf32>
    %25 = vector.shape_cast %24 : vector<1x4x256xf32> to vector<4x256xf32>
    %26 = vector.shape_cast %23 : vector<4x256xf32> to vector<1x4x256xf32>
    tpu.vector_store %arg4[%c0_11, %c0_12, %c0_13], %26 {strides = array<i32>} : memref<1x4x256xf32, #tpu.memory_space<vmem>>, vector<1x4x256xf32>,
    return
  }
  func.func @transform_0(%arg0: i32) -> (i32, i32, i32) {
    %c0_i32 = arith.constant 0 : i32
    %c0_i32_0 = arith.constant 0 : i32
    %c0_i32_1 = arith.constant 0 : i32
    return %arg0, %c0_i32, %c0_i32_0 : i32, i32, i32
  }
  func.func @transform_1(%arg0: i32) -> (i32, i32) {
    %c0_i32 = arith.constant 0 : i32
    %c0_i32_0 = arith.constant 0 : i32
    %c0_i32_1 = arith.constant 0 : i32
    return %c0_i32, %c0_i32_0 : i32, i32
  }
  func.func @transform_2(%arg0: i32) -> (i32, i32) {
    %c0_i32 = arith.constant 0 : i32
    %c0_i32_0 = arith.constant 0 : i32
    %c0_i32_1 = arith.constant 0 : i32
    return %c0_i32, %c0_i32_0 : i32, i32
  }
  func.func @transform_3(%arg0: i32) -> (i32, i32, i32) {
    %c0_i32 = arith.constant 0 : i32
    %c0_i32_0 = arith.constant 0 : i32
    %c0_i32_1 = arith.constant 0 : i32
    return %arg0, %c0_i32, %c0_i32_0 : i32, i32, i32
  }
}

</mosaic_0001>

<llo_original>
// kernel: ca_layer.1
$region0: #{ca_layer.1}
  #allocation0 [shape = 'u32[]', space=smem, size = 0x4, offset = 0x4, fixed_abs, tag = 'smem constant byte address 0x4 - core index']
  #allocation1 [shape = 'u32[144,128]{1,0:T(1,128)}', space=vmem, size = 0x12000, scoped, tag = 'internal scratch']
  %s0 = inlined_call_operand.vmem [shape: f32[2,4,256], index: 0, kind: input, shape index: {}]
  %s1 = inlined_call_operand.vmem [shape: f32[4,1], index: 1, kind: input, shape index: {}]
  %s2 = inlined_call_operand.vmem [shape: f32[4,1], index: 2, kind: input, shape index: {}]
  %s3 = inlined_call_operand.vmem [shape: f32[2,4,256], index: 3, kind: output, shape index: {}]
  %s4 = sld [smem:[#allocation0]]
  $region45: #{ca_layer.1} parent=0
    _
  %s6 = ssub.s32 1, %s4
  %s7 = scalar_select 0, %s6, %s4
  loop: start=0, step=1, limit=4
  $region2: #{ca_layer.1} parent=0 // loop_pre_header
    _
  $region3: #{ca_layer.1} parent=0 // loop_header
    %s9 = sphi 0, %s13
    %p10 = scmp.ge.s32.totalorder %s9, 4
    %s19 = sphi 0, %s21
    %s22 = sphi 0, %s19
    %s23 = sphi 0, %s22
    %s39 = sphi 0, %s23
    %s43 = sphi 0, %s43
    %s45 = sphi 0, %s43
    %s46 = sphi 0, %s45
    %s60 = sphi 0, %s46
    %s64 = sphi 0, %s64
    %s66 = sphi 0, %s64
    %s67 = sphi 0, %s66
    %s81 = sphi 0, %s67
    %s87 = sphi 0, %s89
    %s90 = sphi 0, %s87
    %s91 = sphi 0, %s90
    %s107 = sphi 0, %s91
  $region4: #{ca_layer.1} parent=0 // loop_header_branch
    %12 = sbr.rel (%p10) target = $region8
  $region5: #{ca_layer.1} parent=0 // loop_body
    %s14 = ssub.s32 %s9, 1
    %s15 = ssub.s32 %s9, 2
    %s16 = sadd.s32 %s9, 1
    %s17 = ssub.s32 %s9, %s16
    %p18 = scmp.eq.s32.totalorder %s17, 0
    %s20 = sadd.s32 %s19, 1
    %s21 = scalar_select %p18, %s19, %s20
    %p24 = pneg %p18
    %p25 = scmp.eq.s32.totalorder %s9, 1
    %p26 = por %p24, %p25
    %p27 = scmp.ne.s32.totalorder %s19, %s22
    %p28 = scmp.eq.s32.totalorder %s9, 0
    %p29 = por %p27, %p28
    %p30 = scmp.ne.s32.totalorder %s19, %s22
    %p31 = scmp.eq.s32.totalorder %s14, 1
    %p32 = por %p30, %p31
    %p33 = scmp.ne.s32.totalorder %s22, %s23
    %p34 = scmp.eq.s32.totalorder %s14, 0
    %p35 = por %p33, %p34
    %p36 = scmp.ne.s32.totalorder %s22, %s23
    %p37 = scmp.eq.s32.totalorder %s15, 1
    %p38 = por %p36, %p37
    %p40 = scmp.ne.s32.totalorder %s23, %s39
    %p41 = scmp.eq.s32.totalorder %s15, 0
    %p42 = por %p40, %p41
    %s44 = sadd.s32 %s43, 1
    %p47 = scmp.eq.s32.totalorder %s9, 1
    %p48 = scmp.ne.s32.totalorder %s43, %s45
    %p49 = scmp.eq.s32.totalorder %s9, 0
    %p50 = por %p48, %p49
    %p51 = scmp.ne.s32.totalorder %s43, %s45
    %p52 = scmp.eq.s32.totalorder %s14, 1
    %p53 = por %p51, %p52
    %p54 = scmp.ne.s32.totalorder %s45, %s46
    %p55 = scmp.eq.s32.totalorder %s14, 0
    %p56 = por %p54, %p55
    %p57 = scmp.ne.s32.totalorder %s45, %s46
    %p58 = scmp.eq.s32.totalorder %s15, 1
    %p59 = por %p57, %p58
    %p61 = scmp.ne.s32.totalorder %s46, %s60
    %p62 = scmp.eq.s32.totalorder %s15, 0
    %p63 = por %p61, %p62
    %s65 = sadd.s32 %s64, 1
    %p68 = scmp.eq.s32.totalorder %s9, 1
    %p69 = scmp.ne.s32.totalorder %s64, %s66
    %p70 = scmp.eq.s32.totalorder %s9, 0
    %p71 = por %p69, %p70
    %p72 = scmp.ne.s32.totalorder %s64, %s66
    %p73 = scmp.eq.s32.totalorder %s14, 1
    %p74 = por %p72, %p73
    %p75 = scmp.ne.s32.totalorder %s66, %s67
    %p76 = scmp.eq.s32.totalorder %s14, 0
    %p77 = por %p75, %p76
    %p78 = scmp.ne.s32.totalorder %s66, %s67
    %p79 = scmp.eq.s32.totalorder %s15, 1
    %p80 = por %p78, %p79
    %p82 = scmp.ne.s32.totalorder %s67, %s81
    %p83 = scmp.eq.s32.totalorder %s15, 0
    %p84 = por %p82, %p83
    %s85 = ssub.s32 %s9, %s16
    %p86 = scmp.eq.s32.totalorder %s85, 0
    %s88 = sadd.s32 %s87, 1
    %s89 = scalar_select %p86, %s87, %s88
    %p92 = pneg %p86
    %p93 = scmp.eq.s32.totalorder %s9, 1
    %p94 = por %p92, %p93
    %p95 = scmp.ne.s32.totalorder %s87, %s90
    %p96 = scmp.eq.s32.totalorder %s9, 0
    %p97 = por %p95, %p96
    %p98 = scmp.ne.s32.totalorder %s87, %s90
    %p99 = scmp.eq.s32.totalorder %s14, 1
    %p100 = por %p98, %p99
    %p101 = scmp.ne.s32.totalorder %s90, %s91
    %p102 = scmp.eq.s32.totalorder %s14, 0
    %p103 = por %p101, %p102
    %p104 = scmp.ne.s32.totalorder %s90, %s91
    %p105 = scmp.eq.s32.totalorder %s15, 1
    %p106 = por %p104, %p105
    %p108 = scmp.ne.s32.totalorder %s91, %s107
    %p109 = scmp.eq.s32.totalorder %s15, 0
    %p110 = por %p108, %p109
    %p111 = scmp.le.s32.totalorder 1, %s9
    %p112 = scmp.lt.s32.totalorder %s9, 3
    %p113 = pnand %p111, %p112
    %p114 = pneg %p113
    // Predicated region
    $region9: #{ca_layer.1} parent=5 // pred_check
      _
    $region10: #{ca_layer.1} parent=5 // pred_check_branch
      %116 = sbr.rel (%p113) target = $region12
    $region11: #{ca_layer.1} parent=5 // pred_region
      %s117 = ssub.s32 %s9, 1
      // Predicated region
      $region13: #{ca_layer.1} parent=11 // pred_check
        %p118 = pneg %p56
      $region14: #{ca_layer.1} parent=11 // pred_check_branch
        %120 = sbr.rel (%p118) target = $region16
      $region15: #{ca_layer.1} parent=11 // pred_region
        _
      $region16: #{ca_layer.1} parent=11 // pred_fallthru
        _
      // Predicated region
      $region17: #{ca_layer.1} parent=11 // pred_check
        %p121 = pneg %p77
      $region18: #{ca_layer.1} parent=11 // pred_check_branch
        %123 = sbr.rel (%p121) target = $region20
      $region19: #{ca_layer.1} parent=11 // pred_region
        _
      $region20: #{ca_layer.1} parent=11 // pred_fallthru
        _
    $region12: #{ca_layer.1} parent=5 // pred_fallthru
      _
    %p124 = scmp.lt.s32.totalorder %s9, 2
    // Predicated region
    $region21: #{ca_layer.1} parent=5 // pred_check
      %p125 = pneg %p124
    $region22: #{ca_layer.1} parent=5 // pred_check_branch
      %127 = sbr.rel (%p125) target = $region24
    $region23: #{ca_layer.1} parent=5 // pred_region
      // Predicated region
      $region25: #{ca_layer.1} parent=23 // pred_check
        %p128 = pneg %p29
      $region26: #{ca_layer.1} parent=23 // pred_check_branch
        %130 = sbr.rel (%p128) target = $region28
      $region27: #{ca_layer.1} parent=23 // pred_region
        %p131 = scmp.lt.s32.totalorder %s9, 1
        %s132 = scalar_select %p131, %s9, 1
        %s133 = smul.addr %s132, 2
        %s134 = smul.addr %s133, 4
        %s135 = scalar_lea.vmem %s0, %s134
      $region28: #{ca_layer.1} parent=23 // pred_fallthru
        _
    $region24: #{ca_layer.1} parent=5 // pred_fallthru
      _
    %p136 = scmp.le.s32.totalorder 1, %s9
    %p137 = scmp.lt.s32.totalorder %s9, 3
    %p138 = pnand %p136, %p137
    %p139 = pneg %p138
    // Predicated region
    $region29: #{ca_layer.1} parent=5 // pred_check
      _
    $region30: #{ca_layer.1} parent=5 // pred_check_branch
      %141 = sbr.rel (%p138) target = $region32
    $region31: #{ca_layer.1} parent=5 // pred_region
      %s142 = ssub.s32 %s9, 1
      %p143 = scmp.lt.s32.totalorder %s14, 1
      %s144 = scalar_select %p143, %s14, 1
      %s145 = smul.addr %s144, 2
      %s146 = smul.addr %s145, 4
      %s147 = scalar_lea.vmem %s0, %s146
      %p148 = pneg %p35
      %p149 = pneg %p32
      %p150 = pneg %p56
      %p151 = pneg %p53
      %p152 = pneg %p77
      %p153 = pneg %p74
      %p154 = pneg %p103
      %p155 = pneg %p100
      %p156 = scmp.lt.s32.totalorder %s14, 1
      %s157 = scalar_select %p156, %s14, 1
      %s158 = smul.addr %s157, 2
      %s159 = smul.addr %s158, 4
      %s160 = scalar_lea.vmem %s3, %s159
      %p161 = scmp.lt.s32.totalorder %s14, 1
      %s162 = scalar_select %p161, %s14, 1
      %s163 = smul.addr %s162, 2
      %s164 = smul.addr %s163, 4
      %s165 = scalar_lea.vmem %s0, %s164
      %p166 = scmp.lt.s32.totalorder %s14, 1
      %s167 = scalar_select %p166, %s14, 1
      %s168 = smul.addr %s167, 2
      %s169 = smul.addr %s168, 4
      %s170 = scalar_lea.vmem %s3, %s169
      %v171 = vld [vmem:[%s165] sm:$0xff]
      %v173 = vcombine.high %v171, %v171
      %vm175 = vcmask 1043456
      %v176 = vsel %vm175, %v171, 0.0
      %v177 = vsel %vm175, %v173, 0.0
      %v178 = vadd.f32 %v176, %v177
      %179 = vadd.xlane.f32.xlu0 %v178
      %v180 = vpop.xlane.xlu0 %179
      %v181 = vmul.f32 %v180, 0.00390625
      %v182 = vld [vmem:[%s1] sm:$0xf]
      %v183 = vld [vmem:[%s2] sm:$0xf]
      %v184 = vmul.f32 %v182, %v181
      %vm185 = vcmask 3072
      %v186 = vsel %vm185, %v184, 0.0
      %v187 = vrot.slane %v186, 4
      %v188 = vadd.f32 %v186, %v187
      %v189 = vrot.slane %v188, 2
      %v190 = vadd.f32 %v188, %v189
      %v191 = vrot.slane %v190, 1
      %v192 = vadd.f32 %v190, %v191
      %v193 = vmax.f32 %v192, 0.0
      %v194 = vmul.f32 %v183, %v193
      %v195 = vadd.f32 %v194, 0.0
      %v196 = vxor.u32 %v195, 2147483648
      %v197 = vmul.f32 %v196, 1.442695
      %v198 = vpow.pop %v197
      %v199 = vadd.f32 %v198, 1.0
      %v200 = vrcp.pop %v199
      %v201 = vmul.f32 1.0, %v200
      %203 = vset.pattern.permute.xlu0 0
      %204 = vperm.xlu0 %203, %v201
      %v205 = vpop.permute.xlu0 %204
      %v207 = vunpack.c.l.s4 839922192
      %v208 = vunpack.c.0.s8 %v207
      %v209 = vlaneseq
      %v210 = vshrl.u32 %v209, 7
      %v211 = vsub.s32 %v208, %v210
      %v212 = vrot.slane %v205, %v211
      %v214 = vmul.f32 %v171, %v212
      %215 = vst [vmem:[%s170] sm:$0xff] %v214
      %p216 = scmp.lt.s32.totalorder %s14, 1
      %s217 = scalar_select %p216, %s14, 1
      %s218 = smul.addr %s217, 2
      %s219 = smul.addr %s218, 4
      %s220 = scalar_lea.vmem %s3, %s219
      // Predicated region
      $region33: #{ca_layer.1} parent=31 // pred_check
        %p221 = pneg %p100
      $region34: #{ca_layer.1} parent=31 // pred_check_branch
        %223 = sbr.rel (%p221) target = $region36
      $region35: #{ca_layer.1} parent=31 // pred_region
        _
      $region36: #{ca_layer.1} parent=31 // pred_fallthru
        _
    $region32: #{ca_layer.1} parent=5 // pred_fallthru
      _
    %p224 = scmp.le.s32.totalorder 2, %s9
    // Predicated region
    $region37: #{ca_layer.1} parent=5 // pred_check
      %p225 = pneg %p224
    $region38: #{ca_layer.1} parent=5 // pred_check_branch
      %227 = sbr.rel (%p225) target = $region40
    $region39: #{ca_layer.1} parent=5 // pred_region
      %s228 = ssub.s32 %s9, 2
      // Predicated region
      $region41: #{ca_layer.1} parent=39 // pred_check
        %p229 = pneg %p106
      $region42: #{ca_layer.1} parent=39 // pred_check_branch
        %231 = sbr.rel (%p229) target = $region44
      $region43: #{ca_layer.1} parent=39 // pred_region
        %p232 = scmp.lt.s32.totalorder %s15, 1
        %s233 = scalar_select %p232, %s15, 1
        %s234 = smul.addr %s233, 2
        %s235 = smul.addr %s234, 4
        %s236 = scalar_lea.vmem %s3, %s235
      $region44: #{ca_layer.1} parent=39 // pred_fallthru
        _
    $region40: #{ca_layer.1} parent=5 // pred_fallthru
      _
  $region6: #{ca_layer.1} parent=0 // loop_footer
    %s13 = sadd.s32 1, %s9
  $region7: #{ca_layer.1} parent=0 // loop_footer_branch
    %8 = sbr.rel target = $region3
  $region8: #{ca_layer.1} parent=0 // loop_exit
    _

</llo_original>
